<compile_context>
chip_gen: v7x
topology: tpu7x:2x2x1
jax: 0.10.0
libtpu: 0.0.40
codegen_flags: <defaults>
</compile_context>

<pallas_src>
import functools

import jax
import jax.numpy as jnp
from jax import lax
from jax.experimental import pallas as pl
from jax.experimental.pallas import tpu as pltpu


# ----------------------------- window / band-matrix construction ----------------------

def gaussian_1d(window_size, sigma):
    x = jnp.arange(window_size, dtype=jnp.float32)
    g = jnp.exp(-((x - window_size // 2) ** 2) / (2.0 * sigma ** 2))
    return g / jnp.sum(g)


def band_matrices(H, W, g1d, ws):
    """conv2d(img, outer(g,g), padding=ws//2)  ==  Mh @ img @ MwT."""
    half = ws // 2

    def make(n):
        i = jnp.arange(n)
        d = i[None, :] - i[:, None] + half            # M[r, c] = g1d[c - r + half]
        valid = (d >= 0) & (d < ws)
        return jnp.where(valid, g1d[jnp.clip(d, 0, ws - 1)], 0.0).astype(jnp.float32)

    return make(H), make(W).T


# --------------------------------- the Pallas kernel ---------------------------------

def mef_ssim_kernel(x_ref, y_ref, mh_ref, mwt_ref, q_ref, idx_ref,
                    mu_x_s, sig_x_s, best_sig_s, best_cs_s, best_idx_s, *lum_s,
                    C1, C2, denom_g, denom_l, is_lum, blur_dtype):
    # TODO(synk): the torch NaN/Inf input asserts are not reproduced in-kernel.
    k = pl.program_id(0)
    n_k = pl.num_programs(0)

    x = x_ref[...]                                   # (C, H, W) fused image (resident)
    y = y_ref[...]                                   # (C, H, W) exposure k (pipelined)
    H, W = x.shape[1], x.shape[2]

    mh = mh_ref[...]                                 # (H, H) row-blur band matrix (blur_dtype)
    mwt = mwt_ref[...]                               # (W, W) col-blur band matrix^T, pre-scaled 1/C

    def blur_stack(planes):
        # Batched separable Gaussian blur of n (H, W) channel-SUM planes.
        # The 1/C mean factor is baked into mwt, so the outputs are blurred channel means.
        # Two large MXU matmuls per call; Mh / MwT stay weight-stationary.
        n = len(planes)
        s = jnp.concatenate(planes, axis=0).astype(blur_dtype)                  # (n*H, W)
        t = jnp.dot(s, mwt, preferred_element_type=jnp.float32)                 # (n*H, W)
        t = jnp.concatenate([t[i * H:(i + 1) * H, :] for i in range(n)],
                            axis=1).astype(blur_dtype)                          # (H, n*W)
        u = jnp.dot(mh, t, preferred_element_type=jnp.float32)                  # (H, n*W)
        return [u[:, i * W:(i + 1) * W] for i in range(n)]

    # -- first exposure: init carried state + fused-image statistics ------------------
    @pl.when(k == 0)
    def _init():
        X = jnp.sum(x, axis=0)                       # channel sums; 1/C folded into mwt
        X2 = jnp.sum(x * x, axis=0)
        mu_x0, m2 = blur_stack([X, X2])
        mu_x_s[...] = mu_x0
        sig_x_s[...] = m2 - mu_x0 * mu_x0
        best_sig_s[...] = jnp.full((H, W), -jnp.inf, dtype=jnp.float32)
        best_cs_s[...] = jnp.zeros((H, W), dtype=jnp.float32)
        best_idx_s[...] = jnp.zeros((H, W), dtype=jnp.int32)
        if is_lum:
            lum_s[0][...] = jnp.zeros((H, W), dtype=jnp.float32)
            lum_s[1][...] = jnp.zeros((H, W), dtype=jnp.float32)

    # -- per-exposure statistics: one batched 3-plane blur -----------------------------
    Y = jnp.sum(y, axis=0)
    Y2 = jnp.sum(y * y, axis=0)
    XY = jnp.sum(x * y, axis=0)
    mu_y, b_y2, b_xy = blur_stack([Y, Y2, XY])

    mu_x = mu_x_s[...]
    sig_y = b_y2 - mu_y * mu_y
    sig_xy = b_xy - mu_x * mu_y
    # jnp.maximum(..., 1e-6) matches torch's .clamp(min=1e-06) in the reference.
    cs = (2.0 * sig_xy + C2) / jnp.maximum(sig_x_s[...] + sig_y + C2, 1e-6)

    better = sig_y > best_sig_s[...]                 # strict '>' keeps first-occurrence argmax
    best_idx_s[...] = jnp.where(better, k, best_idx_s[...])
    best_sig_s[...] = jnp.where(better, sig_y, best_sig_s[...])
    best_cs_s[...] = jnp.where(better, cs, best_cs_s[...])

    if is_lum:
        l_y = jnp.mean(mu_y)                                     # scalar image mean (XLU)
        l_g = jnp.exp(-((l_y - 0.5) ** 2) / denom_g)             # one exp per exposure
        l_l = jnp.exp(-((mu_y - 0.5) ** 2) / denom_l)            # per-pixel (EUP)
        ly = l_g * l_l
        lum_s[0][...] = lum_s[0][...] + ly * mu_y
        lum_s[1][...] = lum_s[1][...] + ly

    # -- last exposure: finalize to scalar score + patch-index map --------------------
    @pl.when(k == n_k - 1)
    def _finalize():
        cs_best = best_cs_s[...]
        if is_lum:
            mu_y_f = lum_s[0][...] / lum_s[1][...]
            l_map = (2.0 * mu_x * mu_y_f + C1) / jnp.maximum(
                mu_x * mu_x + mu_y_f * mu_y_f + C1, 1e-6)
            qmap = l_map * cs_best
        else:
            qmap = cs_best
        q_ref[...] = jnp.broadcast_to(jnp.mean(qmap), (1, 1))
        idx_ref[...] = best_idx_s[...]


# ------------------------------------ wrapper ----------------------------------------

class MEFSSIM:
    """Pallas-TPU MEF-SSIM forward (mirrors losses/mef_ssim.py::MEFSSIM)."""

    def __init__(self, window_size=11, channel=3, sigma_g=0.2, sigma_l=0.2,
                 c1=0.01, c2=0.03, is_lum=False, blur_dtype=jnp.float32):
        self.window_size = window_size
        self.channel = channel
        self.denom_g = 2.0 * sigma_g ** 2
        self.denom_l = 2.0 * sigma_l ** 2
        self.C1 = c1 ** 2
        self.C2 = c2 ** 2
        self.is_lum = is_lum
        self.blur_dtype = blur_dtype            # jnp.bfloat16 => ~3x MXU throughput
        self._g1d = gaussian_1d(window_size, window_size / 6.0)
        self._band_cache = {}                   # (H, W, C)    -> (Mh, MwT/C) in blur_dtype
        self._fn_cache = {}                     # (K, C, H, W) -> jitted callable

    def _bands(self, H, W, C):
        key = (H, W, C)
        if key not in self._band_cache:
            Mh, MwT = band_matrices(H, W, self._g1d, self.window_size)
            # Fold the 1/C channel-mean factor into MwT and pre-cast to the matmul dtype
            # so the kernel never casts/scales the band matrices per grid step.
            self._band_cache[key] = (Mh.astype(self.blur_dtype),
                                     (MwT / float(C)).astype(self.blur_dtype))
        return self._band_cache[key]

    def _build(self, K, C, H, W):
        kernel = functools.partial(
            mef_ssim_kernel,
            C1=self.C1, C2=self.C2, denom_g=self.denom_g, denom_l=self.denom_l,
            is_lum=self.is_lum, blur_dtype=self.blur_dtype)

        scratch_shapes = [
            pltpu.VMEM((H, W), jnp.float32),    # mu_x
            pltpu.VMEM((H, W), jnp.float32),    # sig_x
            pltpu.VMEM((H, W), jnp.float32),    # running max sigma_Y
            pltpu.VMEM((H, W), jnp.float32),    # cs at the running argmax
            pltpu.VMEM((H, W), jnp.int32),      # running argmax index
        ]
        if self.is_lum:
            scratch_shapes += [pltpu.VMEM((H, W), jnp.float32),   # sum LY * muY
                               pltpu.VMEM((H, W), jnp.float32)]   # sum LY

        band_bytes = jnp.dtype(self.blur_dtype).itemsize
        n_maps = 40 + (8 if self.is_lum else 0)
        vmem_est = (4 * 6 * C * H * W                 # x resident + y double-buffered
                    + band_bytes * (H * H + W * W)    # band matrices
                    + 4 * n_maps * H * W)             # scratch + blur intermediates
        # Cap at 64 MiB so the same config is valid on v7x (64 MiB physical VMEM).
        vmem_limit = int(min(max(vmem_est, 32 << 20), 64 << 20))

        call = pl.pallas_call(
            kernel,
            grid=(K,),
            in_specs=[
                pl.BlockSpec((C, H, W), lambda k: (0, 0, 0)),           # fused image (resident)
                pl.BlockSpec((None, C, H, W), lambda k: (k, 0, 0, 0)),  # one exposure per step
                pl.BlockSpec((H, H), lambda k: (0, 0)),                 # Mh band matrix
                pl.BlockSpec((W, W), lambda k: (0, 0)),                 # MwT band matrix (/C)
            ],
            out_specs=(
                pl.BlockSpec((1, 1), lambda k: (0, 0)),                 # scalar score
                pl.BlockSpec((H, W), lambda k: (0, 0)),                 # patch-index map
            ),
            out_shape=(jax.ShapeDtypeStruct((1, 1), jnp.float32),
                       jax.ShapeDtypeStruct((H, W), jnp.int32)),        # torch uses int64
            scratch_shapes=scratch_shapes,
            compiler_params=pltpu.CompilerParams(
                dimension_semantics=("arbitrary",),     # carried accumulators over K
                vmem_limit_bytes=vmem_limit),
        )

        Mh, MwT = self._bands(H, W, C)

        @jax.jit
        def fn(output, bunch):
            x = jnp.asarray(output, jnp.float32).reshape(C, H, W)
            y = jnp.asarray(bunch, jnp.float32)
            q, idx = call(x, y, Mh, MwT)
            return q[0, 0], idx

        return fn

    def __call__(self, output, bunch):
        K, C, H, W = bunch.shape
        key = (K, C, H, W)
        if key not in self._fn_cache:
            self._fn_cache[key] = self._build(K, C, H, W)
        return self._fn_cache[key](output, bunch)


# --------------------------- pure-JAX reference (for checking) -----------------------

def reference_mef_ssim(output, bunch, ws, C1, C2, denom_g, denom_l, is_lum):
    K, C, H, W = bunch.shape
    g = gaussian_1d(ws, ws / 6.0)
    window = jnp.broadcast_to(jnp.outer(g, g), (1, C, ws, ws)) / C

    def conv(v):
        return lax.conv_general_dilated(
            v, window, (1, 1), [(ws // 2, ws // 2)] * 2,
            dimension_numbers=('NCHW', 'OIHW', 'NCHW'),
            precision=lax.Precision.HIGHEST)

    muY = conv(bunch).reshape(K, H, W)
    sigY = conv(bunch * bunch).reshape(K, H, W) - muY * muY
    patch = jnp.argmax(sigY, axis=0)
    muX = conv(output).reshape(H, W)
    sigX = conv(output * output).reshape(H, W) - muX * muX
    sigXY = (conv(jnp.broadcast_to(output, bunch.shape) * bunch).reshape(K, H, W)
             - muX[None] * muY)
    cs = (2.0 * sigXY + C2) / jnp.maximum(sigX[None] + sigY + C2, 1e-6)
    cs_map = jnp.take_along_axis(cs, patch[None], axis=0)[0]
    if is_lum:
        lY = jnp.mean(muY.reshape(K, -1), axis=1)
        lL = jnp.exp(-((muY - 0.5) ** 2) / denom_l)
        lG = jnp.exp(-((lY - 0.5) ** 2) / denom_g)[:, None, None]
        LY = lG * lL
        muY_f = jnp.sum(LY * muY, axis=0) / jnp.sum(LY, axis=0)
        l_map = (2.0 * muX * muY_f + C1) / jnp.maximum(muX * muX + muY_f * muY_f + C1, 1e-6)
        q = jnp.mean(l_map * cs_map)
    else:
        q = jnp.mean(cs_map)
    return q, patch


# ------------------------------------- main -------------------------------------------

if __name__ == "__main__":
    key = jax.random.PRNGKey(0)
    k1, k2 = jax.random.split(key)
    K, C, H, W = 4, 3, 16, 16
    output = jax.random.uniform(k1, (1, C, H, W), dtype=jnp.float32)   # fused image
    bunch = jax.random.uniform(k2, (K, C, H, W), dtype=jnp.float32)    # exposure stack

    # 1) contrast-only path (module default), f32 blur.
    model = MEFSSIM(window_size=11, channel=C)
    q, patch_index = model(output, bunch)
    q = jax.block_until_ready(q)
    patch_index = jax.block_until_ready(patch_index)
    q_ref, patch_ref = reference_mef_ssim(output, bunch, 11, model.C1, model.C2,
                                          model.denom_g, model.denom_l, False)
    assert jnp.isfinite(q), "non-finite MEF-SSIM score"
    assert jnp.allclose(q, q_ref, atol=2e-3, rtol=2e-3), (q, q_ref)
    assert jnp.array_equal(patch_index, patch_ref.astype(jnp.int32)), "patch index mismatch"

    # 2) luminance-weighted path (is_lum=True), f32 blur.
    model_lum = MEFSSIM(window_size=11, channel=C, is_lum=True)
    q_l, _ = model_lum(output, bunch)
    q_l = jax.block_until_ready(q_l)
    q_l_ref, _ = reference_mef_ssim(output, bunch, 11, model_lum.C1, model_lum.C2,
                                    model_lum.denom_g, model_lum.denom_l, True)
    assert jnp.isfinite(q_l), "non-finite MEF-SSIM (lum) score"
    assert jnp.allclose(q_l, q_l_ref, atol=2e-3, rtol=2e-3), (q_l, q_l_ref)

    # 3) bf16 blur matmuls (MXU fast path) -- loose sanity check only.
    model_bf16 = MEFSSIM(window_size=11, channel=C, blur_dtype=jnp.bfloat16)
    q_b, _ = model_bf16(output, bunch)
    q_b = jax.block_until_ready(q_b)
    assert jnp.isfinite(q_b), "non-finite MEF-SSIM (bf16) score"
    assert abs(float(q_b) - float(q_ref)) < 5e-2, (q_b, q_ref)

    print("KERNEL_OK")
</pallas_src>

<mosaic_0001>
module attributes {stable_mosaic.version = 11 : i64} {
  func.func @mef_ssim_kernel(%arg0: i32, %arg1: memref<3x16x16xf32, #tpu.memory_space<vmem>>, %arg2: memref<1x3x16x16xf32, #tpu.memory_space<vmem>>, %arg3: memref<16x16xf32, #tpu.memory_space<vmem>>, %arg4: memref<16x16xf32, #tpu.memory_space<vmem>>, %arg5: memref<1x1xf32, #tpu.memory_space<vmem>>, %arg6: memref<16x16xi32, #tpu.memory_space<vmem>>, %arg7: memref<16x16xf32, #tpu.memory_space<vmem>>, %arg8: memref<16x16xf32, #tpu.memory_space<vmem>>, %arg9: memref<16x16xf32, #tpu.memory_space<vmem>>, %arg10: memref<16x16xf32, #tpu.memory_space<vmem>>, %arg11: memref<16x16xi32, #tpu.memory_space<vmem>>) attributes {dimension_semantics = [#tpu.dimension_semantics<arbitrary>], iteration_bounds = array<i64: 4>, scalar_prefetch = 0 : i64, scratch_operands = 5 : i64, tpu.core_type = #tpu.core_type<tc>, window_params = [{pipeline_mode = #tpu.pipeline_mode<synchronous>, transform_indices = @transform_0, window_bounds = array<i64: 3, 16, 16>}, {transform_indices = @transform_1, window_bounds = array<i64: 1, 3, 16, 16>}, {pipeline_mode = #tpu.pipeline_mode<synchronous>, transform_indices = @transform_2, window_bounds = array<i64: 16, 16>}, {pipeline_mode = #tpu.pipeline_mode<synchronous>, transform_indices = @transform_3, window_bounds = array<i64: 16, 16>}, {pipeline_mode = #tpu.pipeline_mode<synchronous>, transform_indices = @transform_4, window_bounds = array<i64: 1, 1>}, {pipeline_mode = #tpu.pipeline_mode<synchronous>, transform_indices = @transform_5, window_bounds = array<i64: 16, 16>}]} {
    %c0 = arith.constant 0 : index
    %c0_0 = arith.constant 0 : index
    %c0_1 = arith.constant 0 : index
    %0 = vector.load %arg1[%c0, %c0_0, %c0_1] : memref<3x16x16xf32, #tpu.memory_space<vmem>>, vector<3x16x16xf32>
    %c0_2 = arith.constant 0 : index
    %c0_3 = arith.constant 0 : index
    %c0_4 = arith.constant 0 : index
    %c0_5 = arith.constant 0 : index
    %1 = vector.load %arg2[%c0_2, %c0_3, %c0_4, %c0_5] : memref<1x3x16x16xf32, #tpu.memory_space<vmem>>, vector<1x3x16x16xf32>
    %2 = vector.shape_cast %1 : vector<1x3x16x16xf32> to vector<3x16x16xf32>
    %c0_6 = arith.constant 0 : index
    %c0_7 = arith.constant 0 : index
    %3 = vector.load %arg3[%c0_6, %c0_7] : memref<16x16xf32, #tpu.memory_space<vmem>>, vector<16x16xf32>
    %c0_8 = arith.constant 0 : index
    %c0_9 = arith.constant 0 : index
    %4 = vector.load %arg4[%c0_8, %c0_9] : memref<16x16xf32, #tpu.memory_space<vmem>>, vector<16x16xf32>
    %c0_i32 = arith.constant 0 : i32
    %5 = arith.cmpi eq, %arg0, %c0_i32 : i32
    %6 = arith.extui %5 : i1 to i32
    %c0_i32_10 = arith.constant 0 : i32
    %7 = arith.cmpi ne, %6, %c0_i32_10 : i32
    scf.if %7 {
      %cst_38 = arith.constant dense<0.000000e+00> : vector<16x16xf32>
      %54 = vector.multi_reduction <add>, %0, %cst_38 [0] : vector<3x16x16xf32> to vector<16x16xf32>
      %55 = arith.mulf %0, %0 : vector<3x16x16xf32>
      %cst_39 = arith.constant dense<0.000000e+00> : vector<16x16xf32>
      %56 = vector.multi_reduction <add>, %55, %cst_39 [0] : vector<3x16x16xf32> to vector<16x16xf32>
      %57 = tpu.concatenate %54, %56 in 0 : vector<16x16xf32>, vector<16x16xf32> -> vector<32x16xf32>
      %cst_40 = arith.constant dense<0.000000e+00> : vector<32x16xf32>
      %58 = tpu.matmul %57, %4, %cst_40 {dimension_numbers = #tpu.dot_dimension_numbers<[1], [0], [0], [1], [0, 0, 1, 1], [], []>} : vector<32x16xf32>, vector<16x16xf32>, vector<32x16xf32> -> vector<32x16xf32>
      %59 = vector.extract_strided_slice %58 {offsets = [0, 0], sizes = [16, 16], strides = [1, 1]} : vector<32x16xf32> to vector<16x16xf32>
      %60 = vector.extract_strided_slice %58 {offsets = [16, 0], sizes = [16, 16], strides = [1, 1]} : vector<32x16xf32> to vector<16x16xf32>
      %61 = tpu.concatenate %59, %60 in 1 : vector<16x16xf32>, vector<16x16xf32> -> vector<16x32xf32>
      %cst_41 = arith.constant dense<0.000000e+00> : vector<16x32xf32>
      %62 = tpu.matmul %3, %61, %cst_41 {dimension_numbers = #tpu.dot_dimension_numbers<[1], [0], [0], [1], [0, 0, 1, 1], [], []>} : vector<16x16xf32>, vector<16x32xf32>, vector<16x32xf32> -> vector<16x32xf32>
      %63 = vector.extract_strided_slice %62 {offsets = [0, 0], sizes = [16, 16], strides = [1, 1]} : vector<16x32xf32> to vector<16x16xf32>
      %64 = vector.extract_strided_slice %62 {offsets = [0, 16], sizes = [16, 16], strides = [1, 1]} : vector<16x32xf32> to vector<16x16xf32>
      %c0_42 = arith.constant 0 : index
      %c0_43 = arith.constant 0 : index
      %65 = vector.load %arg7[%c0_42, %c0_43] : memref<16x16xf32, #tpu.memory_space<vmem>>, vector<16x16xf32>
      tpu.vector_store %arg7[%c0_42, %c0_43], %63 {strides = array<i32>} : memref<16x16xf32, #tpu.memory_space<vmem>>, vector<16x16xf32>,
      %66 = arith.mulf %63, %63 : vector<16x16xf32>
      %67 = arith.subf %64, %66 : vector<16x16xf32>
      %c0_44 = arith.constant 0 : index
      %c0_45 = arith.constant 0 : index
      %68 = vector.load %arg8[%c0_44, %c0_45] : memref<16x16xf32, #tpu.memory_space<vmem>>, vector<16x16xf32>
      tpu.vector_store %arg8[%c0_44, %c0_45], %67 {strides = array<i32>} : memref<16x16xf32, #tpu.memory_space<vmem>>, vector<16x16xf32>,
      %cst_46 = arith.constant 0xFF800000 : f32
      %69 = vector.broadcast %cst_46 : f32 to vector<16x16xf32>
      %c0_47 = arith.constant 0 : index
      %c0_48 = arith.constant 0 : index
      %70 = vector.load %arg9[%c0_47, %c0_48] : memref<16x16xf32, #tpu.memory_space<vmem>>, vector<16x16xf32>
      tpu.vector_store %arg9[%c0_47, %c0_48], %69 {strides = array<i32>} : memref<16x16xf32, #tpu.memory_space<vmem>>, vector<16x16xf32>,
      %cst_49 = arith.constant 0.000000e+00 : f32
      %71 = vector.broadcast %cst_49 : f32 to vector<16x16xf32>
      %c0_50 = arith.constant 0 : index
      %c0_51 = arith.constant 0 : index
      %72 = vector.load %arg10[%c0_50, %c0_51] : memref<16x16xf32, #tpu.memory_space<vmem>>, vector<16x16xf32>
      tpu.vector_store %arg10[%c0_50, %c0_51], %71 {strides = array<i32>} : memref<16x16xf32, #tpu.memory_space<vmem>>, vector<16x16xf32>,
      %c0_i32_52 = arith.constant 0 : i32
      %73 = vector.broadcast %c0_i32_52 : i32 to vector<16x16xi32>
      %c0_53 = arith.constant 0 : index
      %c0_54 = arith.constant 0 : index
      %74 = vector.load %arg11[%c0_53, %c0_54] : memref<16x16xi32, #tpu.memory_space<vmem>>, vector<16x16xi32>
      tpu.vector_store %arg11[%c0_53, %c0_54], %73 {strides = array<i32>} : memref<16x16xi32, #tpu.memory_space<vmem>>, vector<16x16xi32>,
    } else {
    }
    %cst = arith.constant dense<0.000000e+00> : vector<16x16xf32>
    %8 = vector.multi_reduction <add>, %2, %cst [0] : vector<3x16x16xf32> to vector<16x16xf32>
    %9 = arith.mulf %2, %2 : vector<3x16x16xf32>
    %cst_11 = arith.constant dense<0.000000e+00> : vector<16x16xf32>
    %10 = vector.multi_reduction <add>, %9, %cst_11 [0] : vector<3x16x16xf32> to vector<16x16xf32>
    %11 = arith.mulf %0, %2 : vector<3x16x16xf32>
    %cst_12 = arith.constant dense<0.000000e+00> : vector<16x16xf32>
    %12 = vector.multi_reduction <add>, %11, %cst_12 [0] : vector<3x16x16xf32> to vector<16x16xf32>
    %13 = tpu.concatenate %8, %10, %12 in 0 : vector<16x16xf32>, vector<16x16xf32>, vector<16x16xf32> -> vector<48x16xf32>
    %cst_13 = arith.constant dense<0.000000e+00> : vector<48x16xf32>
    %14 = tpu.matmul %13, %4, %cst_13 {dimension_numbers = #tpu.dot_dimension_numbers<[1], [0], [0], [1], [0, 0, 1, 1], [], []>} : vector<48x16xf32>, vector<16x16xf32>, vector<48x16xf32> -> vector<48x16xf32>
    %15 = vector.extract_strided_slice %14 {offsets = [0, 0], sizes = [16, 16], strides = [1, 1]} : vector<48x16xf32> to vector<16x16xf32>
    %16 = vector.extract_strided_slice %14 {offsets = [16, 0], sizes = [16, 16], strides = [1, 1]} : vector<48x16xf32> to vector<16x16xf32>
    %17 = vector.extract_strided_slice %14 {offsets = [32, 0], sizes = [16, 16], strides = [1, 1]} : vector<48x16xf32> to vector<16x16xf32>
    %18 = tpu.concatenate %15, %16, %17 in 1 : vector<16x16xf32>, vector<16x16xf32>, vector<16x16xf32> -> vector<16x48xf32>
    %cst_14 = arith.constant dense<0.000000e+00> : vector<16x48xf32>
    %19 = tpu.matmul %3, %18, %cst_14 {dimension_numbers = #tpu.dot_dimension_numbers<[1], [0], [0], [1], [0, 0, 1, 1], [], []>} : vector<16x16xf32>, vector<16x48xf32>, vector<16x48xf32> -> vector<16x48xf32>
    %20 = vector.extract_strided_slice %19 {offsets = [0, 0], sizes = [16, 16], strides = [1, 1]} : vector<16x48xf32> to vector<16x16xf32>
    %21 = vector.extract_strided_slice %19 {offsets = [0, 16], sizes = [16, 16], strides = [1, 1]} : vector<16x48xf32> to vector<16x16xf32>
    %22 = vector.extract_strided_slice %19 {offsets = [0, 32], sizes = [16, 16], strides = [1, 1]} : vector<16x48xf32> to vector<16x16xf32>
    %c0_15 = arith.constant 0 : index
    %c0_16 = arith.constant 0 : index
    %23 = vector.load %arg7[%c0_15, %c0_16] : memref<16x16xf32, #tpu.memory_space<vmem>>, vector<16x16xf32>
    %24 = arith.mulf %20, %20 : vector<16x16xf32>
    %25 = arith.subf %21, %24 : vector<16x16xf32>
    %26 = arith.mulf %23, %20 : vector<16x16xf32>
    %27 = arith.subf %22, %26 : vector<16x16xf32>
    %cst_17 = arith.constant 2.000000e+00 : f32
    %28 = vector.broadcast %cst_17 : f32 to vector<16x16xf32>
    %29 = arith.mulf %28, %27 : vector<16x16xf32>
    %cst_18 = arith.constant 8.99999984E-4 : f32
    %30 = vector.broadcast %cst_18 : f32 to vector<16x16xf32>
    %31 = arith.addf %29, %30 : vector<16x16xf32>
    %c0_19 = arith.constant 0 : index
    %c0_20 = arith.constant 0 : index
    %32 = vector.load %arg8[%c0_19, %c0_20] : memref<16x16xf32, #tpu.memory_space<vmem>>, vector<16x16xf32>
    %33 = arith.addf %32, %25 : vector<16x16xf32>
    %cst_21 = arith.constant 8.99999984E-4 : f32
    %34 = vector.broadcast %cst_21 : f32 to vector<16x16xf32>
    %35 = arith.addf %33, %34 : vector<16x16xf32>
    %cst_22 = arith.constant 9.99999997E-7 : f32
    %36 = vector.broadcast %cst_22 : f32 to vector<16x16xf32>
    %37 = arith.maximumf %35, %36 : vector<16x16xf32>
    %38 = arith.divf %31, %37 : vector<16x16xf32>
    %c0_23 = arith.constant 0 : index
    %c0_24 = arith.constant 0 : index
    %39 = vector.load %arg9[%c0_23, %c0_24] : memref<16x16xf32, #tpu.memory_space<vmem>>, vector<16x16xf32>
    %40 = arith.cmpf ogt, %25, %39 : vector<16x16xf32>
    %c0_25 = arith.constant 0 : index
    %c0_26 = arith.constant 0 : index
    %41 = vector.load %arg11[%c0_25, %c0_26] : memref<16x16xi32, #tpu.memory_space<vmem>>, vector<16x16xi32>
    %42 = vector.broadcast %arg0 : i32 to vector<16x16xi32>
    %43 = arith.select %40, %42, %41 : vector<16x16xi1>, vector<16x16xi32>
    %c0_27 = arith.constant 0 : index
    %c0_28 = arith.constant 0 : index
    %44 = vector.load %arg11[%c0_27, %c0_28] : memref<16x16xi32, #tpu.memory_space<vmem>>, vector<16x16xi32>
    tpu.vector_store %arg11[%c0_27, %c0_28], %43 {strides = array<i32>} : memref<16x16xi32, #tpu.memory_space<vmem>>, vector<16x16xi32>,
    %c0_29 = arith.constant 0 : index
    %c0_30 = arith.constant 0 : index
    %45 = vector.load %arg9[%c0_29, %c0_30] : memref<16x16xf32, #tpu.memory_space<vmem>>, vector<16x16xf32>
    %46 = arith.select %40, %25, %45 : vector<16x16xi1>, vector<16x16xf32>
    %c0_31 = arith.constant 0 : index
    %c0_32 = arith.constant 0 : index
    %47 = vector.load %arg9[%c0_31, %c0_32] : memref<16x16xf32, #tpu.memory_space<vmem>>, vector<16x16xf32>
    tpu.vector_store %arg9[%c0_31, %c0_32], %46 {strides = array<i32>} : memref<16x16xf32, #tpu.memory_space<vmem>>, vector<16x16xf32>,
    %c0_33 = arith.constant 0 : index
    %c0_34 = arith.constant 0 : index
    %48 = vector.load %arg10[%c0_33, %c0_34] : memref<16x16xf32, #tpu.memory_space<vmem>>, vector<16x16xf32>
    %49 = arith.select %40, %38, %48 : vector<16x16xi1>, vector<16x16xf32>
    %c0_35 = arith.constant 0 : index
    %c0_36 = arith.constant 0 : index
    %50 = vector.load %arg10[%c0_35, %c0_36] : memref<16x16xf32, #tpu.memory_space<vmem>>, vector<16x16xf32>
    tpu.vector_store %arg10[%c0_35, %c0_36], %49 {strides = array<i32>} : memref<16x16xf32, #tpu.memory_space<vmem>>, vector<16x16xf32>,
    %c3_i32 = arith.constant 3 : i32
    %51 = arith.cmpi eq, %arg0, %c3_i32 : i32
    %52 = arith.extui %51 : i1 to i32
    %c0_i32_37 = arith.constant 0 : i32
    %53 = arith.cmpi ne, %52, %c0_i32_37 : i32
    scf.if %53 {
      %c0_38 = arith.constant 0 : index
      %c0_39 = arith.constant 0 : index
      %54 = vector.load %arg10[%c0_38, %c0_39] : memref<16x16xf32, #tpu.memory_space<vmem>>, vector<16x16xf32>
      %55 = vector.shape_cast %54 : vector<16x16xf32> to vector<1x16x16xf32>
      %cst_40 = arith.constant dense<0.000000e+00> : vector<1xf32>
      %56 = vector.multi_reduction <add>, %55, %cst_40 [1, 2] : vector<1x16x16xf32> to vector<1xf32>
      %57 = vector.shape_cast %56 : vector<1xf32> to vector<1x1x1xf32>
      %58 = vector.extract %57[0, 0, 0] : f32 from vector<1x1x1xf32>
      %cst_41 = arith.constant 2.560000e+02 : f32
      %59 = arith.divf %58, %cst_41 : f32
      %60 = vector.broadcast %59 : f32 to vector<1x1xf32>
      %c0_42 = arith.constant 0 : index
      %c0_43 = arith.constant 0 : index
      %61 = vector.load %arg5[%c0_42, %c0_43] : memref<1x1xf32, #tpu.memory_space<vmem>>, vector<1x1xf32>
      tpu.vector_store %arg5[%c0_42, %c0_43], %60 {strides = array<i32>} : memref<1x1xf32, #tpu.memory_space<vmem>>, vector<1x1xf32>,
      %c0_44 = arith.constant 0 : index
      %c0_45 = arith.constant 0 : index
      %62 = vector.load %arg11[%c0_44, %c0_45] : memref<16x16xi32, #tpu.memory_space<vmem>>, vector<16x16xi32>
      %c0_46 = arith.constant 0 : index
      %c0_47 = arith.constant 0 : index
      %63 = vector.load %arg6[%c0_46, %c0_47] : memref<16x16xi32, #tpu.memory_space<vmem>>, vector<16x16xi32>
      tpu.vector_store %arg6[%c0_46, %c0_47], %62 {strides = array<i32>} : memref<16x16xi32, #tpu.memory_space<vmem>>, vector<16x16xi32>,
    } else {
    }
    return
  }
  func.func @transform_0(%arg0: i32) -> (i32, i32, i32) {
    %c0_i32 = arith.constant 0 : i32
    %c0_i32_0 = arith.constant 0 : i32
    %c0_i32_1 = arith.constant 0 : i32
    %c0_i32_2 = arith.constant 0 : i32
    return %c0_i32, %c0_i32_0, %c0_i32_1 : i32, i32, i32
  }
  func.func @transform_1(%arg0: i32) -> (i32, i32, i32, i32) {
    %c0_i32 = arith.constant 0 : i32
    %c0_i32_0 = arith.constant 0 : i32
    %c0_i32_1 = arith.constant 0 : i32
    %c0_i32_2 = arith.constant 0 : i32
    return %arg0, %c0_i32, %c0_i32_0, %c0_i32_1 : i32, i32, i32, i32
  }
  func.func @transform_2(%arg0: i32) -> (i32, i32) {
    %c0_i32 = arith.constant 0 : i32
    %c0_i32_0 = arith.constant 0 : i32
    %c0_i32_1 = arith.constant 0 : i32
    return %c0_i32, %c0_i32_0 : i32, i32
  }
  func.func @transform_3(%arg0: i32) -> (i32, i32) {
    %c0_i32 = arith.constant 0 : i32
    %c0_i32_0 = arith.constant 0 : i32
    %c0_i32_1 = arith.constant 0 : i32
    return %c0_i32, %c0_i32_0 : i32, i32
  }
  func.func @transform_4(%arg0: i32) -> (i32, i32) {
    %c0_i32 = arith.constant 0 : i32
    %c0_i32_0 = arith.constant 0 : i32
    %c0_i32_1 = arith.constant 0 : i32
    return %c0_i32, %c0_i32_0 : i32, i32
  }
  func.func @transform_5(%arg0: i32) -> (i32, i32) {
    %c0_i32 = arith.constant 0 : i32
    %c0_i32_0 = arith.constant 0 : i32
    %c0_i32_1 = arith.constant 0 : i32
    return %c0_i32, %c0_i32_0 : i32, i32
  }
}

</mosaic_0001>

<llo_original>
// kernel: fn.1
$region0: #{fn.1}
  #allocation0 [shape = 'u32[]', space=smem, size = 0x4, offset = 0x4, fixed_abs, tag = 'smem constant byte address 0x4 - core index']
  #allocation1 [shape = 'u32[144,128]{1,0:T(1,128)}', space=vmem, size = 0x12000, scoped, tag = 'internal scratch']
  #allocation2 [shape = 'f32[16,16]{1,0:T(8,128)}', space=vmem, size = 0x2000, scoped, tag = 'scratch operand']
  #allocation3 [shape = 'f32[16,16]{1,0:T(8,128)}', space=vmem, size = 0x2000, scoped, tag = 'scratch operand']
  #allocation4 [shape = 'f32[16,16]{1,0:T(8,128)}', space=vmem, size = 0x2000, scoped, tag = 'scratch operand']
  #allocation5 [shape = 'f32[16,16]{1,0:T(8,128)}', space=vmem, size = 0x2000, scoped, tag = 'scratch operand']
  #allocation6 [shape = 's32[16,16]{1,0:T(8,128)}', space=vmem, size = 0x2000, scoped, tag = 'scratch operand']
  %s0 = inlined_call_operand.hbm [shape: f32[3,16,16], index: 0, kind: input, shape index: {}]
  %s1 = inlined_call_operand.hbm [shape: f32[4,3,16,16], index: 1, kind: input, shape index: {}]
  %s2 = inlined_call_operand.hbm [shape: f32[16,16], index: 2, kind: input, shape index: {}]
  %s3 = inlined_call_operand.hbm [shape: f32[16,16], index: 3, kind: input, shape index: {}]
  %s4 = inlined_call_operand.hbm [shape: f32[1,1], index: 4, kind: output, shape index: {0}]
  %s5 = inlined_call_operand.hbm [shape: s32[16,16], index: 5, kind: output, shape index: {1}]
  %6 = xla_tuple %s4, %s5
  %s7 = sld [smem:[#allocation0]]
  $region81: #{fn.1} parent=0
    _
  %s9 = ssub.s32 1, %s7
  %s10 = scalar_select 0, %s9, %s7
  $region1: #{fn.1} parent=0
    #allocation7 [shape = 'u8[24576]{0}', space=vmem, size = 0x6000, scoped, tag = 'input window, operand 0, single buffered']
    #allocation8 [shape = 's32[2]{0}', space=sflag, size = 0x8, scoped, tag = 'scoped memory for fn.1']
    #allocation9 [shape = 's32[2]{0}', space=sflag, size = 0x8, scoped, tag = 'scoped memory for fn.1']
    #allocation10 [shape = 'u8[49152]{0}', space=vmem, size = 0xc000, scoped, tag = 'input window, operand 1']
    #allocation11 [shape = 's32[2]{0}', space=sflag, size = 0x8, scoped, tag = 'scoped memory for fn.1']
    #allocation12 [shape = 'u8[8192]{0}', space=vmem, size = 0x2000, scoped, tag = 'input window, operand 2, single buffered']
    #allocation13 [shape = 'u8[8192]{0}', space=vmem, size = 0x2000, scoped, tag = 'input window, operand 3, single buffered']
    #allocation14 [shape = 's32[1]{0}', space=sflag, size = 0x4, scoped, tag = 'scoped memory for fn.1']
    #allocation15 [shape = 'u8[512]{0}', space=vmem, size = 0x400, scoped, tag = 'output window, operand 0, single buffered']
    #allocation16 [shape = 'u8[8192]{0}', space=vmem, size = 0x2000, scoped, tag = 'output window, operand 1, single buffered']
    #allocation17 [shape = 's32[1]{0}', space=sflag, size = 0x4, scoped, tag = 'scoped memory for fn.1']
    %11 = vsyncpa [#allocation8], 0
    %12 = vsyncpa [#allocation11], 0
    %s13 = scalar_lea.sflag [#allocation11], 1
    %14 = vsyncpa %s13, 0
    %15 = vsyncpa [#allocation14], 0
    %16 = vsyncpa [#allocation9], 0
    %17 = vsyncpa [#allocation17], 0
    loop: start=0, step=1, limit=6
    $region2: #{fn.1} parent=1 // loop_pre_header
      _
    $region3: #{fn.1} parent=1 // loop_header
      %s19 = sphi 0, %s23
      %p20 = scmp.ge.s32.totalorder %s19, 6
      %s27 = sphi 0, %s27
      %s29 = sphi 0, %s27
      %s30 = sphi 0, %s29
      %s44 = sphi 0, %s30
      %s50 = sphi 0, %s52
      %s53 = sphi 0, %s50
      %s54 = sphi 0, %s53
      %s70 = sphi 0, %s54
      %s74 = sphi 0, %s74
      %s76 = sphi 0, %s74
      %s77 = sphi 0, %s76
      %s91 = sphi 0, %s77
      %s95 = sphi 0, %s95
      %s97 = sphi 0, %s95
      %s98 = sphi 0, %s97
      %s112 = sphi 0, %s98
      %s116 = sphi 0, %s116
      %s118 = sphi 0, %s116
      %s119 = sphi 0, %s118
      %s133 = sphi 0, %s119
      %s137 = sphi 0, %s137
      %s139 = sphi 0, %s137
      %s140 = sphi 0, %s139
      %s154 = sphi 0, %s140
    $region4: #{fn.1} parent=1 // loop_header_branch
      %22 = sbr.rel (%p20) target = $region8
    $region5: #{fn.1} parent=1 // loop_body
      %s24 = ssub.s32 %s19, 1
      %s25 = ssub.s32 %s19, 2
      %s26 = sadd.s32 %s19, 1
      %s28 = sadd.s32 %s27, 1
      %p31 = scmp.eq.s32.totalorder %s19, 3
      %p32 = scmp.ne.s32.totalorder %s27, %s29
      %p33 = scmp.eq.s32.totalorder %s19, 0
      %p34 = por %p32, %p33
      %p35 = scmp.ne.s32.totalorder %s27, %s29
      %p36 = scmp.eq.s32.totalorder %s24, 3
      %p37 = por %p35, %p36
      %p38 = scmp.ne.s32.totalorder %s29, %s30
      %p39 = scmp.eq.s32.totalorder %s24, 0
      %p40 = por %p38, %p39
      %p41 = scmp.ne.s32.totalorder %s29, %s30
      %p42 = scmp.eq.s32.totalorder %s25, 3
      %p43 = por %p41, %p42
      %p45 = scmp.ne.s32.totalorder %s30, %s44
      %p46 = scmp.eq.s32.totalorder %s25, 0
      %p47 = por %p45, %p46
      %s48 = ssub.s32 %s19, %s26
      %p49 = scmp.eq.s32.totalorder %s48, 0
      %s51 = sadd.s32 %s50, 1
      %s52 = scalar_select %p49, %s50, %s51
      %p55 = pneg %p49
      %p56 = scmp.eq.s32.totalorder %s19, 3
      %p57 = por %p55, %p56
      %p58 = scmp.ne.s32.totalorder %s50, %s53
      %p59 = scmp.eq.s32.totalorder %s19, 0
      %p60 = por %p58, %p59
      %p61 = scmp.ne.s32.totalorder %s50, %s53
      %p62 = scmp.eq.s32.totalorder %s24, 3
      %p63 = por %p61, %p62
      %p64 = scmp.ne.s32.totalorder %s53, %s54
      %p65 = scmp.eq.s32.totalorder %s24, 0
      %p66 = por %p64, %p65
      %p67 = scmp.ne.s32.totalorder %s53, %s54
      %p68 = scmp.eq.s32.totalorder %s25, 3
      %p69 = por %p67, %p68
      %p71 = scmp.ne.s32.totalorder %s54, %s70
      %p72 = scmp.eq.s32.totalorder %s25, 0
      %p73 = por %p71, %p72
      %s75 = sadd.s32 %s74, 1
      %p78 = scmp.eq.s32.totalorder %s19, 3
      %p79 = scmp.ne.s32.totalorder %s74, %s76
      %p80 = scmp.eq.s32.totalorder %s19, 0
      %p81 = por %p79, %p80
      %p82 = scmp.ne.s32.totalorder %s74, %s76
      %p83 = scmp.eq.s32.totalorder %s24, 3
      %p84 = por %p82, %p83
      %p85 = scmp.ne.s32.totalorder %s76, %s77
      %p86 = scmp.eq.s32.totalorder %s24, 0
      %p87 = por %p85, %p86
      %p88 = scmp.ne.s32.totalorder %s76, %s77
      %p89 = scmp.eq.s32.totalorder %s25, 3
      %p90 = por %p88, %p89
      %p92 = scmp.ne.s32.totalorder %s77, %s91
      %p93 = scmp.eq.s32.totalorder %s25, 0
      %p94 = por %p92, %p93
      %s96 = sadd.s32 %s95, 1
      %p99 = scmp.eq.s32.totalorder %s19, 3
      %p100 = scmp.ne.s32.totalorder %s95, %s97
      %p101 = scmp.eq.s32.totalorder %s19, 0
      %p102 = por %p100, %p101
      %p103 = scmp.ne.s32.totalorder %s95, %s97
      %p104 = scmp.eq.s32.totalorder %s24, 3
      %p105 = por %p103, %p104
      %p106 = scmp.ne.s32.totalorder %s97, %s98
      %p107 = scmp.eq.s32.totalorder %s24, 0
      %p108 = por %p106, %p107
      %p109 = scmp.ne.s32.totalorder %s97, %s98
      %p110 = scmp.eq.s32.totalorder %s25, 3
      %p111 = por %p109, %p110
      %p113 = scmp.ne.s32.totalorder %s98, %s112
      %p114 = scmp.eq.s32.totalorder %s25, 0
      %p115 = por %p113, %p114
      %s117 = sadd.s32 %s116, 1
      %p120 = scmp.eq.s32.totalorder %s19, 3
      %p121 = scmp.ne.s32.totalorder %s116, %s118
      %p122 = scmp.eq.s32.totalorder %s19, 0
      %p123 = por %p121, %p122
      %p124 = scmp.ne.s32.totalorder %s116, %s118
      %p125 = scmp.eq.s32.totalorder %s24, 3
      %p126 = por %p124, %p125
      %p127 = scmp.ne.s32.totalorder %s118, %s119
      %p128 = scmp.eq.s32.totalorder %s24, 0
      %p129 = por %p127, %p128
      %p130 = scmp.ne.s32.totalorder %s118, %s119
      %p131 = scmp.eq.s32.totalorder %s25, 3
      %p132 = por %p130, %p131
      %p134 = scmp.ne.s32.totalorder %s119, %s133
      %p135 = scmp.eq.s32.totalorder %s25, 0
      %p136 = por %p134, %p135
      %s138 = sadd.s32 %s137, 1
      %p141 = scmp.eq.s32.totalorder %s19, 3
      %p142 = scmp.ne.s32.totalorder %s137, %s139
      %p143 = scmp.eq.s32.totalorder %s19, 0
      %p144 = por %p142, %p143
      %p145 = scmp.ne.s32.totalorder %s137, %s139
      %p146 = scmp.eq.s32.totalorder %s24, 3
      %p147 = por %p145, %p146
      %p148 = scmp.ne.s32.totalorder %s139, %s140
      %p149 = scmp.eq.s32.totalorder %s24, 0
      %p150 = por %p148, %p149
      %p151 = scmp.ne.s32.totalorder %s139, %s140
      %p152 = scmp.eq.s32.totalorder %s25, 3
      %p153 = por %p151, %p152
      %p155 = scmp.ne.s32.totalorder %s140, %s154
      %p156 = scmp.eq.s32.totalorder %s25, 0
      %p157 = por %p155, %p156
      %p158 = scmp.le.s32.totalorder 1, %s19
      %p159 = scmp.lt.s32.totalorder %s19, 5
      %p160 = pnand %p158, %p159
      %p161 = pneg %p160
      // Predicated region
      $region9: #{fn.1} parent=5 // pred_check
        _
      $region10: #{fn.1} parent=5 // pred_check_branch
        %163 = sbr.rel (%p160) target = $region12
      $region11: #{fn.1} parent=5 // pred_region
        %s164 = ssub.s32 %s19, 1
        // Predicated region
        $region13: #{fn.1} parent=11 // pred_check
          %p165 = pneg %p40
        $region14: #{fn.1} parent=11 // pred_check_branch
          %167 = sbr.rel (%p165) target = $region16
        $region15: #{fn.1} parent=11 // pred_region
          %s169 = ssub.s32 768, 768
          %170 = vsyncadd [#allocation8], %s169
          %s171 = sshll.u32 [#allocation7], 4
          %s172 = int_to_ptr.vmem [resolvable:$true] %s171
          %177 = dma.hbm_to_vmem [thread:$0]  %s0, 768, %s172, [#allocation8], 128, 128, 8
        $region16: #{fn.1} parent=11 // pred_fallthru
          _
        // Predicated region
        $region17: #{fn.1} parent=11 // pred_check
          %p178 = pneg %p87
        $region18: #{fn.1} parent=11 // pred_check_branch
          %180 = sbr.rel (%p178) target = $region20
        $region19: #{fn.1} parent=11 // pred_region
          %s182 = ssub.s32 256, 256
          %183 = vsyncadd [#allocation11], %s182
          %s184 = sshll.u32 [#allocation12], 4
          %s185 = int_to_ptr.vmem [resolvable:$true] %s184
          %190 = dma.hbm_to_vmem [thread:$0]  %s2, 256, %s185, [#allocation11], 128, 128, 8
        $region20: #{fn.1} parent=11 // pred_fallthru
          _
        // Predicated region
        $region21: #{fn.1} parent=11 // pred_check
          %p191 = pneg %p108
        $region22: #{fn.1} parent=11 // pred_check_branch
          %193 = sbr.rel (%p191) target = $region24
        $region23: #{fn.1} parent=11 // pred_region
          %s195 = ssub.s32 256, 256
          %196 = vsyncadd [#allocation14], %s195
          %s197 = sshll.u32 [#allocation13], 4
          %s198 = int_to_ptr.vmem [resolvable:$true] %s197
          %203 = dma.hbm_to_vmem [thread:$0]  %s3, 256, %s198, [#allocation14], 128, 128, 8
        $region24: #{fn.1} parent=11 // pred_fallthru
          _
      $region12: #{fn.1} parent=5 // pred_fallthru
        _
      %p204 = scmp.lt.s32.totalorder %s19, 4
      // Predicated region
      $region25: #{fn.1} parent=5 // pred_check
        %p205 = pneg %p204
      $region26: #{fn.1} parent=5 // pred_check_branch
        %207 = sbr.rel (%p205) target = $region28
      $region27: #{fn.1} parent=5 // pred_region
        // Predicated region
        $region29: #{fn.1} parent=27 // pred_check
          %p208 = pneg %p60
        $region30: #{fn.1} parent=27 // pred_check_branch
          %210 = sbr.rel (%p208) target = $region32
        $region31: #{fn.1} parent=27 // pred_region
          %s211 = sand.u32 %s19, 1
          %s212 = scalar_lea.sflag [#allocation11], %s211
          %s213 = sand.u32 %s50, 1
          %s214 = smul.addr %s213, 48
          %s215 = scalar_lea.vmem [#allocation10], %s214
          %s217 = ssub.s32 768, 768
          %218 = vsyncadd %s212, %s217
          %s219 = smul.addr %s19, 6
          %s220 = smul.addr %s219, 128
          %s221 = scalar_lea.hbm %s1, %s220
          %s222 = sshll.u32 %s215, 4
          %s223 = int_to_ptr.vmem [resolvable:$true] %s222
          %228 = dma.hbm_to_vmem [thread:$0]  %s221, 768, %s223, %s212, 128, 128, 8
        $region32: #{fn.1} parent=27 // pred_fallthru
          _
      $region28: #{fn.1} parent=5 // pred_fallthru
        _
      %p229 = scmp.le.s32.totalorder 1, %s19
      %p230 = scmp.lt.s32.totalorder %s19, 5
      %p231 = pnand %p229, %p230
      %p232 = pneg %p231
      // Predicated region
      $region33: #{fn.1} parent=5 // pred_check
        _
      $region34: #{fn.1} parent=5 // pred_check_branch
        %234 = sbr.rel (%p231) target = $region36
      $region35: #{fn.1} parent=5 // pred_region
        %s235 = ssub.s32 %s19, 1
        // Predicated region
        $region37: #{fn.1} parent=35 // pred_check
          %p236 = pneg %p40
        $region38: #{fn.1} parent=35 // pred_check_branch
          %238 = sbr.rel (%p236) target = $region40
        $region39: #{fn.1} parent=35 // pred_region
          %239 = dma.done [#allocation8], 768
        $region40: #{fn.1} parent=35 // pred_fallthru
          _
        %s240 = sand.u32 %s24, 1
        %s241 = scalar_lea.sflag [#allocation11], %s240
        %s242 = sand.u32 %s53, 1
        %s243 = smul.addr %s242, 48
        %s244 = scalar_lea.vmem [#allocation10], %s243
        // Predicated region
        $region41: #{fn.1} parent=35 // pred_check
          %p245 = pneg %p66
        $region42: #{fn.1} parent=35 // pred_check_branch
          %247 = sbr.rel (%p245) target = $region44
        $region43: #{fn.1} parent=35 // pred_region
          %248 = dma.done %s241, 768
        $region44: #{fn.1} parent=35 // pred_fallthru
          _
        // Predicated region
        $region45: #{fn.1} parent=35 // pred_check
          %p249 = pneg %p87
        $region46: #{fn.1} parent=35 // pred_check_branch
          %251 = sbr.rel (%p249) target = $region48
        $region47: #{fn.1} parent=35 // pred_region
          %252 = dma.done [#allocation11], 256
        $region48: #{fn.1} parent=35 // pred_fallthru
          _
        // Predicated region
        $region49: #{fn.1} parent=35 // pred_check
          %p253 = pneg %p108
        $region50: #{fn.1} parent=35 // pred_check_branch
          %255 = sbr.rel (%p253) target = $region52
        $region51: #{fn.1} parent=35 // pred_region
          %256 = dma.done [#allocation14], 256
        $region52: #{fn.1} parent=35 // pred_fallthru
          _
        %p257 = pneg %p40
        %p258 = pneg %p37
        %s259 = sand.u32 %s24, 1
        %s260 = scalar_lea.sflag [#allocation11], %s259
        %s261 = sand.u32 %s53, 1
        %s262 = smul.addr %s261, 48
        %s263 = scalar_lea.vmem [#allocation10], %s262
        %p264 = pneg %p66
        %p265 = pneg %p63
        %p266 = pneg %p87
        %p267 = pneg %p84
        %p268 = pneg %p108
        %p269 = pneg %p105
        %p270 = pneg %p129
        %p271 = pneg %p126
        %p272 = pneg %p150
        %p273 = pneg %p147
        %v274 = vld [vmem:[#allocation7] sm:$0xff]
        %v275 = vld [vmem:[#allocation7 + $0x8] sm:$0xff]
        %v276 = vld [vmem:[#allocation7 + $0x10] sm:$0xff]
        %v277 = vld [vmem:[#allocation7 + $0x18] sm:$0xff]
        %v278 = vld [vmem:[#allocation7 + $0x20] sm:$0xff]
        %v279 = vld [vmem:[#allocation7 + $0x28] sm:$0xff]
        %v280 = vld [vmem:[%s244] sm:$0xff]
        %v281 = vld [vmem:[%s244 + $0x8] sm:$0xff]
        %v282 = vld [vmem:[%s244 + $0x10] sm:$0xff]
        %v283 = vld [vmem:[%s244 + $0x18] sm:$0xff]
        %v284 = vld [vmem:[%s244 + $0x20] sm:$0xff]
        %v285 = vld [vmem:[%s244 + $0x28] sm:$0xff]
        %v286 = vld [vmem:[#allocation12] sm:$0xff]
        %v287 = vld [vmem:[#allocation12 + $0x8] sm:$0xff]
        %v288 = vld [vmem:[#allocation13] sm:$0xff]
        %v289 = vld [vmem:[#allocation13 + $0x8] sm:$0xff]
        %p290 = scmp.eq.s32.totalorder %s24, 0
        // Predicated region
        $region53: #{fn.1} parent=35 // pred_check
          %p291 = pneg %p290
        $region54: #{fn.1} parent=35 // pred_check_branch
          %293 = sbr.rel (%p291) target = $region56
        $region55: #{fn.1} parent=35 // pred_region
          %vm294 = vcmask 130048
          %v295 = vsel %vm294, %v274, 0.0
          %v296 = vsel %vm294, %v276, 0.0
          %v297 = vadd.f32 %v295, %v296
          %v298 = vsel %vm294, %v278, 0.0
          %v299 = vadd.f32 %v297, %v298
          %v300 = vsel %vm294, %v275, 0.0
          %v301 = vsel %vm294, %v277, 0.0
          %v302 = vadd.f32 %v300, %v301
          %v303 = vsel %vm294, %v279, 0.0
          %v304 = vadd.f32 %v302, %v303
          %v305 = vmul.f32 %v274, %v274
          %v306 = vmul.f32 %v275, %v275
          %v307 = vmul.f32 %v276, %v276
          %v308 = vmul.f32 %v277, %v277
          %v309 = vmul.f32 %v278, %v278
          %v310 = vmul.f32 %v279, %v279
          %v311 = vsel %vm294, %v305, 0.0
          %v312 = vsel %vm294, %v307, 0.0
          %v313 = vadd.f32 %v311, %v312
          %v314 = vsel %vm294, %v309, 0.0
          %v315 = vadd.f32 %v313, %v314
          %v316 = vsel %vm294, %v306, 0.0
          %v317 = vsel %vm294, %v308, 0.0
          %v318 = vadd.f32 %v316, %v317
          %v319 = vsel %vm294, %v310, 0.0
          %v320 = vadd.f32 %v318, %v319
          %v322 = vsel %vm294, %v299, 0
          %v325 = vsel %vm294, %v304, 0
          %v328 = vsel %vm294, %v315, 0
          %v331 = vsel %vm294, %v320, 0
          %333 = vmatprep.subr.mxu0 0.0
          %334 = vmatpush1.msra.mxu0 %v288
          %335 = vmatprep.subr.mxu0 0.0
          %336 = vmatpush1.msra.mxu0 %v289
          %337 = vmatprep.subr.mxu0 0.0
          %338 = vmatpush1.msra.mxu0 0.0
          %339 = vmatprep.subr.mxu0 0.0
          %340 = vmatpush1.msra.mxu0 0.0
          %341 = vmatprep.subr.mxu0 0.0
          %342 = vmatpush1.msra.mxu0 0.0
          %343 = vmatprep.subr.mxu0 0.0
          %344 = vmatpush1.msra.mxu0 0.0
          %345 = vmatprep.subr.mxu0 0.0
          %346 = vmatpush1.msra.mxu0 0.0
          %347 = vmatprep.subr.mxu0 0.0
          %348 = vmatpush1.msra.mxu0 0.0
          %349 = vmatprep.subr.mxu0 0.0
          %350 = vmatpush1.msra.mxu0 0.0
          %351 = vmatprep.subr.mxu0 0.0
          %352 = vmatpush1.msra.mxu0 0.0
          %353 = vmatprep.subr.mxu0 0.0
          %354 = vmatpush1.msra.mxu0 0.0
          %355 = vmatprep.subr.mxu0 0.0
          %356 = vmatpush1.msra.mxu0 0.0
          %357 = vmatprep.subr.mxu0 0.0
          %358 = vmatpush1.msra.mxu0 0.0
          %359 = vmatprep.subr.mxu0 0.0
          %360 = vmatpush1.msra.mxu0 0.0
          %361 = vmatprep.subr.mxu0 0.0
          %362 = vmatpush1.msra.mxu0 0.0
          %363 = vmatprep.subr.mxu0 0.0
          %364 = vmatpush1.msra.mxu0 0.0
          %365 = vmatprep.subr.mxu0 0.0
          %366 = vmatpush1.msra.mxu0 0.0
          %367 = vmatprep.subr.mxu0 0.0
          %368 = vmatpush1.msra.mxu0 0.0
          %369 = vmatprep.subr.mxu0 0.0
          %370 = vmatpush1.msra.mxu0 0.0
          %371 = vmatprep.subr.mxu0 0.0
          %372 = vmatpush1.msra.mxu0 0.0
          %373 = vmatprep.subr.mxu0 0.0
          %374 = vmatpush1.msra.mxu0 0.0
          %375 = vmatprep.subr.mxu0 0.0
          %376 = vmatpush1.msra.mxu0 0.0
          %377 = vmatprep.subr.mxu0 0.0
          %378 = vmatpush1.msra.mxu0 0.0
          %379 = vmatprep.subr.mxu0 0.0
          %380 = vmatpush1.msra.mxu0 0.0
          %381 = vmatprep.subr.mxu0 0.0
          %382 = vmatpush1.msra.mxu0 0.0
          %383 = vmatprep.subr.mxu0 0.0
          %384 = vmatpush1.msra.mxu0 0.0
          %385 = vmatprep.subr.mxu0 0.0
          %386 = vmatpush1.msra.mxu0 0.0
          %387 = vmatprep.subr.mxu0 0.0
          %388 = vmatpush1.msra.mxu0 0.0
          %389 = vmatprep.subr.mxu0 0.0
          %390 = vmatpush1.msra.mxu0 0.0
          %391 = vmatprep.subr.mxu0 0.0
          %392 = vmatpush1.msra.mxu0 0.0
          %393 = vmatprep.subr.mxu0 0.0
          %394 = vmatpush1.msra.mxu0 0.0
          %395 = vmatprep.subr.mxu0 0.0
          %396 = vmatpush1.msra.mxu0 0.0
          %397 = vmatprep.mubr.f32.mxu0 0.0
          %398 = vmatmul.mubr.f32.gmra.mrb[0].mxu0 %v322
          %v399 = vpop.f32.mrb[0].mxu0
          %v400 = vadd.f32 0.0, %v399
          %v401 = vpop.f32.mrb[0].mxu0
          %402 = vmatprep.mubr.f32.mxu0 0.0
          %403 = vmatmul.mubr.f32.gmra.mrb[0].mxu0 %v325
          %v404 = vpop.f32.mrb[0].mxu0
          %v405 = vadd.f32 0.0, %v404
          %v406 = vpop.f32.mrb[0].mxu0
          %407 = vmatprep.mubr.f32.mxu0 0.0
          %408 = vmatmul.mubr.f32.gmra.mrb[0].mxu0 %v328
          %v409 = vpop.f32.mrb[0].mxu0
          %v410 = vadd.f32 0.0, %v409
          %v411 = vpop.f32.mrb[0].mxu0
          %412 = vmatprep.mubr.f32.mxu0 0.0
          %413 = vmatmul.mubr.f32.gmra.mrb[0].mxu0 %v331
          %v414 = vpop.f32.mrb[0].mxu0
          %v415 = vadd.f32 0.0, %v414
          %v416 = vpop.f32.mrb[0].mxu0
          %417 = vdwg.mxu0
          %420 = vrot.lane.b32.xlu0 %v410, 16
          %v421 = vpop.permute.xlu0 %420
          %422 = vrot.lane.b32.xlu0 %v415, 16
          %v423 = vpop.permute.xlu0 %422
          %v426 = vsel %vm294, %v400, %v421
          %v427 = vsel %vm294, %v405, %v423
          %v429 = vsel %vm294, %v286, 0
          %v432 = vsel %vm294, %v287, 0
          %434 = vmatprep.subr.mxu0 0.0
          %435 = vmatpush1.msra.mxu0 %v426
          %436 = vmatprep.subr.mxu0 0.0
          %437 = vmatpush1.msra.mxu0 %v427
          %438 = vmatprep.subr.mxu0 0.0
          %439 = vmatpush1.msra.mxu0 0.0
          %440 = vmatprep.subr.mxu0 0.0
          %441 = vmatpush1.msra.mxu0 0.0
          %442 = vmatprep.subr.mxu0 0.0
          %443 = vmatpush1.msra.mxu0 0.0
          %444 = vmatprep.subr.mxu0 0.0
          %445 = vmatpush1.msra.mxu0 0.0
          %446 = vmatprep.subr.mxu0 0.0
          %447 = vmatpush1.msra.mxu0 0.0
          %448 = vmatprep.subr.mxu0 0.0
          %449 = vmatpush1.msra.mxu0 0.0
          %450 = vmatprep.subr.mxu0 0.0
          %451 = vmatpush1.msra.mxu0 0.0
          %452 = vmatprep.subr.mxu0 0.0
          %453 = vmatpush1.msra.mxu0 0.0
          %454 = vmatprep.subr.mxu0 0.0
          %455 = vmatpush1.msra.mxu0 0.0
          %456 = vmatprep.subr.mxu0 0.0
          %457 = vmatpush1.msra.mxu0 0.0
          %458 = vmatprep.subr.mxu0 0.0
          %459 = vmatpush1.msra.mxu0 0.0
          %460 = vmatprep.subr.mxu0 0.0
          %461 = vmatpush1.msra.mxu0 0.0
          %462 = vmatprep.subr.mxu0 0.0
          %463 = vmatpush1.msra.mxu0 0.0
          %464 = vmatprep.subr.mxu0 0.0
          %465 = vmatpush1.msra.mxu0 0.0
          %466 = vmatprep.subr.mxu0 0.0
          %467 = vmatpush1.msra.mxu0 0.0
          %468 = vmatprep.subr.mxu0 0.0
          %469 = vmatpush1.msra.mxu0 0.0
          %470 = vmatprep.subr.mxu0 0.0
          %471 = vmatpush1.msra.mxu0 0.0
          %472 = vmatprep.subr.mxu0 0.0
          %473 = vmatpush1.msra.mxu0 0.0
          %474 = vmatprep.subr.mxu0 0.0
          %475 = vmatpush1.msra.mxu0 0.0
          %476 = vmatprep.subr.mxu0 0.0
          %477 = vmatpush1.msra.mxu0 0.0
          %478 = vmatprep.subr.mxu0 0.0
          %479 = vmatpush1.msra.mxu0 0.0
          %480 = vmatprep.subr.mxu0 0.0
          %481 = vmatpush1.msra.mxu0 0.0
          %482 = vmatprep.subr.mxu0 0.0
          %483 = vmatpush1.msra.mxu0 0.0
          %484 = vmatprep.subr.mxu0 0.0
          %485 = vmatpush1.msra.mxu0 0.0
          %486 = vmatprep.subr.mxu0 0.0
          %487 = vmatpush1.msra.mxu0 0.0
          %488 = vmatprep.subr.mxu0 0.0
          %489 = vmatpush1.msra.mxu0 0.0
          %490 = vmatprep.subr.mxu0 0.0
          %491 = vmatpush1.msra.mxu0 0.0
          %492 = vmatprep.subr.mxu0 0.0
          %493 = vmatpush1.msra.mxu0 0.0
          %494 = vmatprep.subr.mxu0 0.0
          %495 = vmatpush1.msra.mxu0 0.0
          %496 = vmatprep.subr.mxu0 0.0
          %497 = vmatpush1.msra.mxu0 0.0
          %498 = vmatprep.mubr.f32.mxu0 0.0
          %499 = vmatmul.mubr.f32.gmra.mrb[0].mxu0 %v429
          %v500 = vpop.f32.mrb[0].mxu0
          %v501 = vadd.f32 0.0, %v500
          %v502 = vpop.f32.mrb[0].mxu0
          %503 = vmatprep.mubr.f32.mxu0 0.0
          %504 = vmatmul.mubr.f32.gmra.mrb[0].mxu0 %v432
          %v505 = vpop.f32.mrb[0].mxu0
          %v506 = vadd.f32 0.0, %v505
          %v507 = vpop.f32.mrb[0].mxu0
          %508 = vdwg.mxu0
          %509 = vst.msk [vmem:[#allocation2] sm:$0xff] %vm294, %v501
          %510 = vst.msk [vmem:[#allocation2 + $0x8] sm:$0xff] %vm294, %v506
          %v511 = vmul.f32 %v501, %v501
          %v512 = vmul.f32 %v506, %v506
          %515 = vrot.lane.b32.xlu0 %v511, 16
          %v516 = vpop.permute.xlu0 %515
          %517 = vrot.lane.b32.xlu0 %v512, 16
          %v518 = vpop.permute.xlu0 %517
          %v521 = vsub.f32 %v501, %v516
          %v522 = vsub.f32 %v506, %v518
          %525 = vrot.lane.b32.xlu0 %v521, 112
          %v526 = vpop.permute.xlu0 %525
          %527 = vrot.lane.b32.xlu0 %v522, 112
          %v528 = vpop.permute.xlu0 %527
          %531 = vst.msk [vmem:[#allocation3] sm:$0xff] %vm294, %v526
          %532 = vst.msk [vmem:[#allocation3 + $0x8] sm:$0xff] %vm294, %v528
          %533 = vst.msk [vmem:[#allocation4] sm:$0xff] %vm294, -inf
          %534 = vst.msk [vmem:[#allocation4 + $0x8] sm:$0xff] %vm294, -inf
          %535 = vst.msk [vmem:[#allocation5] sm:$0xff] %vm294, 0.0
          %536 = vst.msk [vmem:[#allocation5 + $0x8] sm:$0xff] %vm294, 0.0
          %537 = vst.msk [vmem:[#allocation6] sm:$0xff] %vm294, 0
          %538 = vst.msk [vmem:[#allocation6 + $0x8] sm:$0xff] %vm294, 0
        $region56: #{fn.1} parent=35 // pred_fallthru
          _
        %vm539 = vcmask 130048
        %v540 = vsel %vm539, %v280, 0.0
        %v541 = vsel %vm539, %v282, 0.0
        %v542 = vadd.f32 %v540, %v541
        %v543 = vsel %vm539, %v284, 0.0
        %v544 = vadd.f32 %v542, %v543
        %v545 = vsel %vm539, %v281, 0.0
        %v546 = vsel %vm539, %v283, 0.0
        %v547 = vadd.f32 %v545, %v546
        %v548 = vsel %vm539, %v285, 0.0
        %v549 = vadd.f32 %v547, %v548
        %v550 = vmul.f32 %v280, %v280
        %v551 = vmul.f32 %v281, %v281
        %v552 = vmul.f32 %v282, %v282
        %v553 = vmul.f32 %v283, %v283
        %v554 = vmul.f32 %v284, %v284
        %v555 = vmul.f32 %v285, %v285
        %v556 = vsel %vm539, %v550, 0.0
        %v557 = vsel %vm539, %v552, 0.0
        %v558 = vadd.f32 %v556, %v557
        %v559 = vsel %vm539, %v554, 0.0
        %v560 = vadd.f32 %v558, %v559
        %v561 = vsel %vm539, %v551, 0.0
        %v562 = vsel %vm539, %v553, 0.0
        %v563 = vadd.f32 %v561, %v562
        %v564 = vsel %vm539, %v555, 0.0
        %v565 = vadd.f32 %v563, %v564
        %v566 = vmul.f32 %v274, %v280
        %v567 = vmul.f32 %v275, %v281
        %v568 = vmul.f32 %v276, %v282
        %v569 = vmul.f32 %v277, %v283
        %v570 = vmul.f32 %v278, %v284
        %v571 = vmul.f32 %v279, %v285
        %v572 = vsel %vm539, %v566, 0.0
        %v573 = vsel %vm539, %v568, 0.0
        %v574 = vadd.f32 %v572, %v573
        %v575 = vsel %vm539, %v570, 0.0
        %v576 = vadd.f32 %v574, %v575
        %v577 = vsel %vm539, %v567, 0.0
        %v578 = vsel %vm539, %v569, 0.0
        %v579 = vadd.f32 %v577, %v578
        %v580 = vsel %vm539, %v571, 0.0
        %v581 = vadd.f32 %v579, %v580
        %v583 = vsel %vm539, %v544, 0
        %v586 = vsel %vm539, %v549, 0
        %v589 = vsel %vm539, %v560, 0
        %v592 = vsel %vm539, %v565, 0
        %v595 = vsel %vm539, %v576, 0
        %v598 = vsel %vm539, %v581, 0
        %600 = vmatprep.subr.mxu0 0.0
        %601 = vmatpush1.msra.mxu0 %v288
        %602 = vmatprep.subr.mxu0 0.0
        %603 = vmatpush1.msra.mxu0 %v289
        %604 = vmatprep.subr.mxu0 0.0
        %605 = vmatpush1.msra.mxu0 0.0
        %606 = vmatprep.subr.mxu0 0.0
        %607 = vmatpush1.msra.mxu0 0.0
        %608 = vmatprep.subr.mxu0 0.0
        %609 = vmatpush1.msra.mxu0 0.0
        %610 = vmatprep.subr.mxu0 0.0
        %611 = vmatpush1.msra.mxu0 0.0
        %612 = vmatprep.subr.mxu0 0.0
        %613 = vmatpush1.msra.mxu0 0.0
        %614 = vmatprep.subr.mxu0 0.0
        %615 = vmatpush1.msra.mxu0 0.0
        %616 = vmatprep.subr.mxu0 0.0
        %617 = vmatpush1.msra.mxu0 0.0
        %618 = vmatprep.subr.mxu0 0.0
        %619 = vmatpush1.msra.mxu0 0.0
        %620 = vmatprep.subr.mxu0 0.0
        %621 = vmatpush1.msra.mxu0 0.0
        %622 = vmatprep.subr.mxu0 0.0
        %623 = vmatpush1.msra.mxu0 0.0
        %624 = vmatprep.subr.mxu0 0.0
        %625 = vmatpush1.msra.mxu0 0.0
        %626 = vmatprep.subr.mxu0 0.0
        %627 = vmatpush1.msra.mxu0 0.0
        %628 = vmatprep.subr.mxu0 0.0
        %629 = vmatpush1.msra.mxu0 0.0
        %630 = vmatprep.subr.mxu0 0.0
        %631 = vmatpush1.msra.mxu0 0.0
        %632 = vmatprep.subr.mxu0 0.0
        %633 = vmatpush1.msra.mxu0 0.0
        %634 = vmatprep.subr.mxu0 0.0
        %635 = vmatpush1.msra.mxu0 0.0
        %636 = vmatprep.subr.mxu0 0.0
        %637 = vmatpush1.msra.mxu0 0.0
        %638 = vmatprep.subr.mxu0 0.0
        %639 = vmatpush1.msra.mxu0 0.0
        %640 = vmatprep.subr.mxu0 0.0
        %641 = vmatpush1.msra.mxu0 0.0
        %642 = vmatprep.subr.mxu0 0.0
        %643 = vmatpush1.msra.mxu0 0.0
        %644 = vmatprep.subr.mxu0 0.0
        %645 = vmatpush1.msra.mxu0 0.0
        %646 = vmatprep.subr.mxu0 0.0
        %647 = vmatpush1.msra.mxu0 0.0
        %648 = vmatprep.subr.mxu0 0.0
        %649 = vmatpush1.msra.mxu0 0.0
        %650 = vmatprep.subr.mxu0 0.0
        %651 = vmatpush1.msra.mxu0 0.0
        %652 = vmatprep.subr.mxu0 0.0
        %653 = vmatpush1.msra.mxu0 0.0
        %654 = vmatprep.subr.mxu0 0.0
        %655 = vmatpush1.msra.mxu0 0.0
        %656 = vmatprep.subr.mxu0 0.0
        %657 = vmatpush1.msra.mxu0 0.0
        %658 = vmatprep.subr.mxu0 0.0
        %659 = vmatpush1.msra.mxu0 0.0
        %660 = vmatprep.subr.mxu0 0.0
        %661 = vmatpush1.msra.mxu0 0.0
        %662 = vmatprep.subr.mxu0 0.0
        %663 = vmatpush1.msra.mxu0 0.0
        %664 = vmatprep.mubr.f32.mxu0 0.0
        %665 = vmatmul.mubr.f32.gmra.mrb[0].mxu0 %v583
        %v666 = vpop.f32.mrb[0].mxu0
        %v667 = vadd.f32 0.0, %v666
        %v668 = vpop.f32.mrb[0].mxu0
        %669 = vmatprep.mubr.f32.mxu0 0.0
        %670 = vmatmul.mubr.f32.gmra.mrb[0].mxu0 %v586
        %v671 = vpop.f32.mrb[0].mxu0
        %v672 = vadd.f32 0.0, %v671
        %v673 = vpop.f32.mrb[0].mxu0
        %674 = vmatprep.mubr.f32.mxu0 0.0
        %675 = vmatmul.mubr.f32.gmra.mrb[0].mxu0 %v589
        %v676 = vpop.f32.mrb[0].mxu0
        %v677 = vadd.f32 0.0, %v676
        %v678 = vpop.f32.mrb[0].mxu0
        %679 = vmatprep.mubr.f32.mxu0 0.0
        %680 = vmatmul.mubr.f32.gmra.mrb[0].mxu0 %v592
        %v681 = vpop.f32.mrb[0].mxu0
        %v682 = vadd.f32 0.0, %v681
        %v683 = vpop.f32.mrb[0].mxu0
        %684 = vmatprep.mubr.f32.mxu0 0.0
        %685 = vmatmul.mubr.f32.gmra.mrb[0].mxu0 %v595
        %v686 = vpop.f32.mrb[0].mxu0
        %v687 = vadd.f32 0.0, %v686
        %v688 = vpop.f32.mrb[0].mxu0
        %689 = vmatprep.mubr.f32.mxu0 0.0
        %690 = vmatmul.mubr.f32.gmra.mrb[0].mxu0 %v598
        %v691 = vpop.f32.mrb[0].mxu0
        %v692 = vadd.f32 0.0, %v691
        %v693 = vpop.f32.mrb[0].mxu0
        %694 = vdwg.mxu0
        %697 = vrot.lane.b32.xlu0 %v677, 16
        %v698 = vpop.permute.xlu0 %697
        %699 = vrot.lane.b32.xlu0 %v682, 16
        %v700 = vpop.permute.xlu0 %699
        %705 = vrot.lane.b32.xlu0 %v687, 32
        %v706 = vpop.permute.xlu0 %705
        %707 = vrot.lane.b32.xlu0 %v692, 32
        %v708 = vpop.permute.xlu0 %707
        %v711 = vsel %vm539, %v667, %v698
        %v712 = vsel %vm539, %v672, %v700
        %vm713 = vcmask 261120
        %v714 = vsel %vm713, %v711, %v706
        %v715 = vsel %vm713, %v712, %v708
        %v717 = vsel %vm539, %v286, 0
        %v720 = vsel %vm539, %v287, 0
        %722 = vmatprep.subr.mxu0 0.0
        %723 = vmatpush1.msra.mxu0 %v714
        %724 = vmatprep.subr.mxu0 0.0
        %725 = vmatpush1.msra.mxu0 %v715
        %726 = vmatprep.subr.mxu0 0.0
        %727 = vmatpush1.msra.mxu0 0.0
        %728 = vmatprep.subr.mxu0 0.0
        %729 = vmatpush1.msra.mxu0 0.0
        %730 = vmatprep.subr.mxu0 0.0
        %731 = vmatpush1.msra.mxu0 0.0
        %732 = vmatprep.subr.mxu0 0.0
        %733 = vmatpush1.msra.mxu0 0.0
        %734 = vmatprep.subr.mxu0 0.0
        %735 = vmatpush1.msra.mxu0 0.0
        %736 = vmatprep.subr.mxu0 0.0
        %737 = vmatpush1.msra.mxu0 0.0
        %738 = vmatprep.subr.mxu0 0.0
        %739 = vmatpush1.msra.mxu0 0.0
        %740 = vmatprep.subr.mxu0 0.0
        %741 = vmatpush1.msra.mxu0 0.0
        %742 = vmatprep.subr.mxu0 0.0
        %743 = vmatpush1.msra.mxu0 0.0
        %744 = vmatprep.subr.mxu0 0.0
        %745 = vmatpush1.msra.mxu0 0.0
        %746 = vmatprep.subr.mxu0 0.0
        %747 = vmatpush1.msra.mxu0 0.0
        %748 = vmatprep.subr.mxu0 0.0
        %749 = vmatpush1.msra.mxu0 0.0
        %750 = vmatprep.subr.mxu0 0.0
        %751 = vmatpush1.msra.mxu0 0.0
        %752 = vmatprep.subr.mxu0 0.0
        %753 = vmatpush1.msra.mxu0 0.0
        %754 = vmatprep.subr.mxu0 0.0
        %755 = vmatpush1.msra.mxu0 0.0
        %756 = vmatprep.subr.mxu0 0.0
        %757 = vmatpush1.msra.mxu0 0.0
        %758 = vmatprep.subr.mxu0 0.0
        %759 = vmatpush1.msra.mxu0 0.0
        %760 = vmatprep.subr.mxu0 0.0
        %761 = vmatpush1.msra.mxu0 0.0
        %762 = vmatprep.subr.mxu0 0.0
        %763 = vmatpush1.msra.mxu0 0.0
        %764 = vmatprep.subr.mxu0 0.0
        %765 = vmatpush1.msra.mxu0 0.0
        %766 = vmatprep.subr.mxu0 0.0
        %767 = vmatpush1.msra.mxu0 0.0
        %768 = vmatprep.subr.mxu0 0.0
        %769 = vmatpush1.msra.mxu0 0.0
        %770 = vmatprep.subr.mxu0 0.0
        %771 = vmatpush1.msra.mxu0 0.0
        %772 = vmatprep.subr.mxu0 0.0
        %773 = vmatpush1.msra.mxu0 0.0
        %774 = vmatprep.subr.mxu0 0.0
        %775 = vmatpush1.msra.mxu0 0.0
        %776 = vmatprep.subr.mxu0 0.0
        %777 = vmatpush1.msra.mxu0 0.0
        %778 = vmatprep.subr.mxu0 0.0
        %779 = vmatpush1.msra.mxu0 0.0
        %780 = vmatprep.subr.mxu0 0.0
        %781 = vmatpush1.msra.mxu0 0.0
        %782 = vmatprep.subr.mxu0 0.0
        %783 = vmatpush1.msra.mxu0 0.0
        %784 = vmatprep.subr.mxu0 0.0
        %785 = vmatpush1.msra.mxu0 0.0
        %786 = vmatprep.mubr.f32.mxu0 0.0
        %787 = vmatmul.mubr.f32.gmra.mrb[0].mxu0 %v717
        %v788 = vpop.f32.mrb[0].mxu0
        %v789 = vadd.f32 0.0, %v788
        %v790 = vpop.f32.mrb[0].mxu0
        %791 = vmatprep.mubr.f32.mxu0 0.0
        %792 = vmatmul.mubr.f32.gmra.mrb[0].mxu0 %v720
        %v793 = vpop.f32.mrb[0].mxu0
        %v794 = vadd.f32 0.0, %v793
        %v795 = vpop.f32.mrb[0].mxu0
        %796 = vdwg.mxu0
        %v797 = vld [vmem:[#allocation2] sm:$0xff]
        %v798 = vld [vmem:[#allocation2 + $0x8] sm:$0xff]
        %v799 = vmul.f32 %v789, %v789
        %v800 = vmul.f32 %v794, %v794
        %803 = vrot.lane.b32.xlu0 %v799, 16
        %v804 = vpop.permute.xlu0 %803
        %805 = vrot.lane.b32.xlu0 %v800, 16
        %v806 = vpop.permute.xlu0 %805
        %v809 = vsub.f32 %v789, %v804
        %v810 = vsub.f32 %v794, %v806
        %v811 = vmul.f32 %v797, %v789
        %v812 = vmul.f32 %v798, %v794
        %815 = vrot.lane.b32.xlu0 %v811, 32
        %v816 = vpop.permute.xlu0 %815
        %817 = vrot.lane.b32.xlu0 %v812, 32
        %v818 = vpop.permute.xlu0 %817
        %v821 = vsub.f32 %v789, %v816
        %v822 = vsub.f32 %v794, %v818
        %v823 = vmul.f32 %v821, 2.0
        %v824 = vmul.f32 %v822, 2.0
        %v825 = vadd.f32 %v823, 0.0009
        %v826 = vadd.f32 %v824, 0.0009
        %v827 = vld [vmem:[#allocation3] sm:$0xff]
        %v828 = vld [vmem:[#allocation3 + $0x8] sm:$0xff]
        %831 = vrot.lane.b32.xlu0 %v809, 112
        %v832 = vpop.permute.xlu0 %831
        %833 = vrot.lane.b32.xlu0 %v810, 112
        %v834 = vpop.permute.xlu0 %833
        %v837 = vadd.f32 %v827, %v832
        %v838 = vadd.f32 %v828, %v834
        %v839 = vadd.f32 %v837, 0.0009
        %v840 = vadd.f32 %v838, 0.0009
        %v841 = vmax.f32 %v839, 1e-06
        %v842 = vmax.f32 %v840, 1e-06
        %845 = vrot.lane.b32.xlu0 %v841, 32
        %v846 = vpop.permute.xlu0 %845
        %847 = vrot.lane.b32.xlu0 %v842, 32
        %v848 = vpop.permute.xlu0 %847
        %v851 = vrcp.pop %v846
        %v852 = vmul.f32 %v825, %v851
        %v853 = vrcp.pop %v848
        %v854 = vmul.f32 %v826, %v853
        %v855 = vld [vmem:[#allocation4] sm:$0xff]
        %v856 = vld [vmem:[#allocation4 + $0x8] sm:$0xff]
        %859 = vrot.lane.b32.xlu0 %v855, 16
        %v860 = vpop.permute.xlu0 %859
        %861 = vrot.lane.b32.xlu0 %v856, 16
        %v862 = vpop.permute.xlu0 %861
        %vm865 = vcmp.gt.f32.partialorder %v809, %v860
        %vm866 = vcmp.gt.f32.partialorder %v810, %v862
        %v867 = vld [vmem:[#allocation6] sm:$0xff]
        %v868 = vld [vmem:[#allocation6 + $0x8] sm:$0xff]
        %v869 = vstv %s24
        %870 = vrot.lane.b32.xlu0 %v867, 16
        %v871 = vpop.permute.xlu0 %870
        %872 = vrot.lane.b32.xlu0 %v868, 16
        %v873 = vpop.permute.xlu0 %872
        %v874 = vsel %vm865, %v869, %v871
        %v875 = vsel %vm866, %v869, %v873
        %876 = vrot.lane.b32.xlu0 %v874, 112
        %v877 = vpop.permute.xlu0 %876
        %878 = vrot.lane.b32.xlu0 %v875, 112
        %v879 = vpop.permute.xlu0 %878
        %880 = vst.msk [vmem:[#allocation6] sm:$0xff] %vm539, %v877
        %881 = vst.msk [vmem:[#allocation6 + $0x8] sm:$0xff] %vm539, %v879
        %v882 = vld [vmem:[#allocation4] sm:$0xff]
        %v883 = vld [vmem:[#allocation4 + $0x8] sm:$0xff]
        %886 = vrot.lane.b32.xlu0 %v882, 16
        %v887 = vpop.permute.xlu0 %886
        %888 = vrot.lane.b32.xlu0 %v883, 16
        %v889 = vpop.permute.xlu0 %888
        %v892 = vsel %vm865, %v809, %v887
        %v893 = vsel %vm866, %v810, %v889
        %896 = vrot.lane.b32.xlu0 %v892, 112
        %v897 = vpop.permute.xlu0 %896
        %898 = vrot.lane.b32.xlu0 %v893, 112
        %v899 = vpop.permute.xlu0 %898
        %902 = vst.msk [vmem:[#allocation4] sm:$0xff] %vm539, %v897
        %903 = vst.msk [vmem:[#allocation4 + $0x8] sm:$0xff] %vm539, %v899
        %v904 = vld [vmem:[#allocation5] sm:$0xff]
        %v905 = vld [vmem:[#allocation5 + $0x8] sm:$0xff]
        %908 = vrot.lane.b32.xlu0 %v852, 112
        %v909 = vpop.permute.xlu0 %908
        %910 = vrot.lane.b32.xlu0 %v854, 112
        %v911 = vpop.permute.xlu0 %910
        %916 = vrot.lane.b32.xlu0 %v904, 16
        %v917 = vpop.permute.xlu0 %916
        %918 = vrot.lane.b32.xlu0 %v905, 16
        %v919 = vpop.permute.xlu0 %918
        %v922 = vsel %vm865, %v909, %v917
        %v923 = vsel %vm866, %v911, %v919
        %926 = vrot.lane.b32.xlu0 %v922, 112
        %v927 = vpop.permute.xlu0 %926
        %928 = vrot.lane.b32.xlu0 %v923, 112
        %v929 = vpop.permute.xlu0 %928
        %932 = vst.msk [vmem:[#allocation5] sm:$0xff] %vm539, %v927
        %933 = vst.msk [vmem:[#allocation5 + $0x8] sm:$0xff] %vm539, %v929
        %p934 = scmp.eq.s32.totalorder %s24, 3
        // Predicated region
        $region57: #{fn.1} parent=35 // pred_check
          %p935 = pneg %p934
        $region58: #{fn.1} parent=35 // pred_check_branch
          %937 = sbr.rel (%p935) target = $region60
        $region59: #{fn.1} parent=35 // pred_region
          %v938 = vld [vmem:[#allocation5] sm:$0xff]
          %v939 = vld [vmem:[#allocation5 + $0x8] sm:$0xff]
          %v940 = vsel %vm539, %v938, 0.0
          %v941 = vsel %vm539, %v939, 0.0
          %v942 = vadd.f32 %v940, %v941
          %943 = vadd.xlane.f32.xlu0 %v942
          %v944 = vpop.xlane.xlu0 %943
          %v945 = vrot.slane %v944, 4
          %v946 = vadd.f32 %v944, %v945
          %v947 = vrot.slane %v946, 2
          %v948 = vadd.f32 %v946, %v947
          %v949 = vrot.slane %v948, 1
          %v950 = vadd.f32 %v948, %v949
          %s951 = vtos %v950
          %v952 = vrcp.pop 256.0
          %s953 = vtos %v952
          %s954 = smul.f32 %s951, %s953
          %v955 = vstv %s954
          %vm956 = vcmask 0
          %957 = vst.msk [vmem:[#allocation15] sm:$0x1] %vm956, %v955
          %v958 = vld [vmem:[#allocation6] sm:$0xff]
          %v959 = vld [vmem:[#allocation6 + $0x8] sm:$0xff]
          %960 = vst.msk [vmem:[#allocation16] sm:$0xff] %vm539, %v958
          %961 = vst.msk [vmem:[#allocation16 + $0x8] sm:$0xff] %vm539, %v959
        $region60: #{fn.1} parent=35 // pred_fallthru
          _
        // Predicated region
        $region61: #{fn.1} parent=35 // pred_check
          %p962 = pneg %p126
        $region62: #{fn.1} parent=35 // pred_check_branch
          %964 = sbr.rel (%p962) target = $region64
        $region63: #{fn.1} parent=35 // pred_region
          %s966 = ssub.s32 16, 16
          %967 = vsyncadd [#allocation9], %s966
          %s969 = sshll.u32 [#allocation15], 4
          %s970 = int_to_ptr.vmem [resolvable:$true] %s969
          %972 = dma.vmem_to_hbm [thread:$0]  %s970, 16, %s4, [#allocation9]
        $region64: #{fn.1} parent=35 // pred_fallthru
          _
        // Predicated region
        $region65: #{fn.1} parent=35 // pred_check
          %p973 = pneg %p147
        $region66: #{fn.1} parent=35 // pred_check_branch
          %975 = sbr.rel (%p973) target = $region68
        $region67: #{fn.1} parent=35 // pred_region
          %s977 = ssub.s32 256, 256
          %978 = vsyncadd [#allocation17], %s977
          %s979 = sshll.u32 [#allocation16], 4
          %s980 = int_to_ptr.vmem [resolvable:$true] %s979
          %985 = dma.vmem_to_hbm [thread:$0]  %s980, 256, %s5, [#allocation17], 128, 128, 8
        $region68: #{fn.1} parent=35 // pred_fallthru
          _
        // Predicated region
        $region69: #{fn.1} parent=35 // pred_check
          %p986 = pneg %p126
        $region70: #{fn.1} parent=35 // pred_check_branch
          %988 = sbr.rel (%p986) target = $region72
        $region71: #{fn.1} parent=35 // pred_region
          %989 = dma.done [#allocation9], 16
        $region72: #{fn.1} parent=35 // pred_fallthru
          _
        // Predicated region
        $region73: #{fn.1} parent=35 // pred_check
          %p990 = pneg %p147
        $region74: #{fn.1} parent=35 // pred_check_branch
          %992 = sbr.rel (%p990) target = $region76
        $region75: #{fn.1} parent=35 // pred_region
          %993 = dma.done [#allocation17], 256
        $region76: #{fn.1} parent=35 // pred_fallthru
          _
      $region36: #{fn.1} parent=5 // pred_fallthru
        _
      %p994 = scmp.le.s32.totalorder 2, %s19
      // Predicated region
      $region77: #{fn.1} parent=5 // pred_check
        %p995 = pneg %p994
      $region78: #{fn.1} parent=5 // pred_check_branch
        %997 = sbr.rel (%p995) target = $region80
      $region79: #{fn.1} parent=5 // pred_region
        %s998 = ssub.s32 %s19, 2
      $region80: #{fn.1} parent=5 // pred_fallthru
        _
    $region6: #{fn.1} parent=1 // loop_footer
      %s23 = sadd.s32 1, %s19
    $region7: #{fn.1} parent=1 // loop_footer_branch
      %18 = sbr.rel target = $region3
    $region8: #{fn.1} parent=1 // loop_exit
      _
    %999 = vsyncpa [#allocation8], 1
    %s1000 = scalar_lea.sflag [#allocation8], 1
    %1001 = vsyncpa %s1000, 1
    %1002 = vsyncpa [#allocation11], 1
    %s1003 = scalar_lea.sflag [#allocation11], 1
    %1004 = vsyncpa %s1003, 1
    %1005 = vsyncpa [#allocation14], 1
    %1006 = vsyncpa [#allocation9], 1
    %s1007 = scalar_lea.sflag [#allocation9], 1
    %1008 = vsyncpa %s1007, 1
    %1009 = vsyncpa [#allocation17], 1

</llo_original>
